<compile_context>
chip_gen: v5e
topology: v5e:2x2
jax: 0.10.0
libtpu: 0.0.40
codegen_flags: <defaults>
</compile_context>

<pallas_src>
import jax
import jax.numpy as jnp
from jax.experimental import pallas as pl
from jax.experimental.pallas import tpu as pltpu


def _forward_stub_kernel(x_hbm, o_hbm, sem):
    # Abstract Model.forward placeholder: one whole-array HBM->HBM DMA.
    # No grid, no VMEM staging — the DMA engine moves the bytes while the
    # TensorCore does nothing, which is the cheapest legal on-device copy.
    cp = pltpu.make_async_copy(x_hbm, o_hbm, sem)
    cp.start()
    cp.wait()


def model_forward(x: jax.Array) -> jax.Array:
    """Pallas 'forward' for the abstract Model: identity over the batch.

    Implemented as a single HBM->HBM DMA (no BlockSpec tiling, no VMEM
    round trip, no padding).  Works for any shape/dtype because the source
    and destination share the same logical shape and layout.
    """
    if x.size == 0:
        # Nothing to copy; a Pallas call over an empty array is meaningless.
        return x

    squeeze_back = False
    if x.ndim == 0:
        # Give the DMA a rank-1 view for scalar inputs.
        x = x.reshape((1,))
        squeeze_back = True

    out = pl.pallas_call(
        _forward_stub_kernel,
        out_shape=jax.ShapeDtypeStruct(x.shape, x.dtype),
        in_specs=[pl.BlockSpec(memory_space=pl.ANY)],   # raw HBM ref, no auto-DMA
        out_specs=pl.BlockSpec(memory_space=pl.ANY),    # raw HBM ref, no auto-DMA
        scratch_shapes=[pltpu.SemaphoreType.DMA],
    )(x)

    if squeeze_back:
        out = out.reshape(())
    return out


class Model:
    """JAX/Pallas mirror of the abstract xnmtorch Model."""

    def __init__(self, elide_identity: bool = False):
        self._initialized = False
        if elide_identity:
            # Review item 1: the identity forward costs nothing if we simply
            # return the input.  Subclasses with real compute flip this off.
            self._forward = lambda batch: batch
        else:
            # Keep the Pallas template path (single-DMA stub) so concrete
            # subclasses have a kernel skeleton to replace with real compute.
            self._forward = jax.jit(model_forward)

    def forward(self, batch: jax.Array) -> jax.Array:
        # Abstract in the reference; here: identity pass-through.
        return self._forward(batch)

    def __call__(self, batch: jax.Array) -> jax.Array:
        return self.forward(batch)

    def inference(self, batch: jax.Array) -> jax.Array:
        return self(batch)

    def initialize(self, optimizer=None):
        # TODO(synk): apex-AMP mixed precision has no Pallas equivalent.
        self._initialized = True


if __name__ == "__main__":
    key = jax.random.PRNGKey(0)
    # Small NCHW-style batch consistent with a typical Batch input.
    x = jax.random.normal(key, (2, 4, 16, 16), dtype=jnp.float32)

    model = Model()
    model.initialize()
    y = jax.block_until_ready(model.inference(x))
    assert y.shape == x.shape and y.dtype == x.dtype
    assert bool(jnp.allclose(y, x)), "identity forward mismatch (f32)"

    # Ragged, non-128-multiple bf16 shape: previously required pad + slice,
    # now handled by the same whole-array DMA with zero extra HBM passes.
    x2 = jax.random.normal(jax.random.PRNGKey(1), (4, 7, 96)).astype(jnp.bfloat16)
    y2 = jax.block_until_ready(model.inference(x2))
    assert y2.shape == x2.shape and y2.dtype == x2.dtype
    assert bool(jnp.array_equal(y2, x2)), "identity forward mismatch (bf16)"

    # Zero-element input short-circuits (previously crashed at trace time).
    x3 = jnp.zeros((0, 4), jnp.float32)
    y3 = jax.block_until_ready(model.inference(x3))
    assert y3.shape == x3.shape and y3.dtype == x3.dtype

    # Fully elided identity (the review's 100%-win path).
    y4 = Model(elide_identity=True).inference(x)
    assert bool(jnp.allclose(y4, x))

    print("KERNEL_OK")
</pallas_src>

<mosaic_0001>
module attributes {stable_mosaic.version = 11 : i64} {
  func.func @_forward_stub_kernel(%arg0: memref<2x4x16x16xf32, #tpu.memory_space<any>>, %arg1: memref<2x4x16x16xf32, #tpu.memory_space<any>>, %arg2: memref<!tpu.dma_semaphore, #tpu.memory_space<semaphore_mem>>) attributes {dimension_semantics = [], scalar_prefetch = 0 : i64, scratch_operands = 1 : i64, tpu.core_type = #tpu.core_type<tc>} {
    tpu.enqueue_dma source(%arg0 : memref<2x4x16x16xf32, #tpu.memory_space<any>>) target(%arg1 : memref<2x4x16x16xf32, #tpu.memory_space<any>>) target_semaphore(%arg2 : memref<!tpu.dma_semaphore, #tpu.memory_space<semaphore_mem>>)
    tpu.wait_dma2 semaphore(%arg2 : memref<!tpu.dma_semaphore, #tpu.memory_space<semaphore_mem>>) src(%arg0 : memref<2x4x16x16xf32, #tpu.memory_space<any>>) dst(%arg1 : memref<2x4x16x16xf32, #tpu.memory_space<any>>)
    return
  }
}

</mosaic_0001>

<llo_original>
// kernel: model_forward.1
$region0: #{model_forward.1}
  #allocation0 [shape = 'u32[]', space=smem, size = 0x4, offset = 0x4, fixed_abs, tag = 'smem constant byte address 0x4 - core index']
  #allocation1 [shape = 'u32[72,128]{1,0:T(1,128)}', space=vmem, size = 0x9000, scoped, tag = 'internal scratch']
  #allocation2 [shape = 's32[1]{0}', space=sflag, size = 0x4, scoped, tag = 'scratch operand']
  #allocation3 [shape = 's32[]', space=sflag, size = 0x4, offset = 0, fixed_abs, tag = 'sflag constant byte address 0x0 - dummy sync flag']
  #allocation4 [shape = 'u32[0]{0}', space=smem, size = 0, offset = 0, fixed_abs, tag = 'smem constant byte address 0x0 - null']
  %s0 = inlined_call_operand.hbm [shape: f32[2,4,16,16], index: 0, kind: input, shape index: {}]
  %s1 = inlined_call_operand.hbm [shape: f32[2,4,16,16], index: 1, kind: output, shape index: {}]
  %s2 = sld [smem:[#allocation0]]
  $region2: #{model_forward.1} parent=0
    _
  %s4 = ssub.s32 1, %s2
  %s5 = scalar_select 0, %s4, %s2
  %s7 = sshll.u32 1, 14
  %s8 = sxor.u32 4294967295, %s7
  %s10 = sshll.u32 %s0, 4
  %s11 = int_to_ptr.hbm [resolvable:$true] %s10
  %s12 = sshll.u32 %s1, 4
  %s13 = int_to_ptr.hbm [resolvable:$true] %s12
  %16 = dma.general %s11, 2048, %s13, [#allocation2], [#allocation3], [#allocation4], 0, 0
  %s17 = smul.u32 2, 4
  %s18 = smul.u32 %s17, 16
  %s19 = smul.u32 %s18, 1
  %s20 = sshll.u32 %s19, 4
  %21 = dma.done [#allocation2], %s20
  %22 = vsyncmov [#allocation2]
  %s23 = vpop.sfrf %22
  %p24 = scmp.eq.s32.totalorder %s23, 0
  %p25 = pneg %p24
  %27 = shalt.err (%p25)

</llo_original>
